<compile_context>
chip_gen: v6e
topology: v6e:2x2x1
jax: 0.10.0
libtpu: 0.0.40
codegen_flags: <defaults>
</compile_context>

<pallas_src>
import functools

import jax
import jax.numpy as jnp
from jax.experimental import pallas as pl
from jax.experimental.pallas import tpu as pltpu

TILE = 128  # node tile (dst and src); multiple of (8, 128) for f32 / (32, 128) for int8.


# ---------------------------------------------------------------------------
# Kernel A: per-node projection  feat = x @ W  and attention logits er / el^T.
# ---------------------------------------------------------------------------
def _proj_kernel(x_ref, w_ref, alt_ref, arpk_ref, feat_ref, er_ref, elt_ref):
    x = x_ref[...].astype(jnp.bfloat16)                         # (T, Din)
    w = w_ref[...].astype(jnp.bfloat16)                         # (Din, H*F)
    feat = jnp.dot(x, w, preferred_element_type=jnp.float32)    # (T, H*F) f32 acc
    feat_ref[...] = feat.astype(jnp.bfloat16)
    # er[j, h]  = <feat_j^(h), attn_r^(h)>   (dst orientation: nodes on sublanes)
    er_ref[...] = jnp.dot(feat, arpk_ref[...], preferred_element_type=jnp.float32)
    # el_t[h, i] = <feat_i^(h), attn_l^(h)>  (src orientation: nodes on lanes)
    elt_ref[...] = jax.lax.dot_general(
        alt_ref[...], feat, (((1,), (1,)), ((), ())),
        preferred_element_type=jnp.float32)


def _project(x, w, al_t, ar_pk, *, num_heads, out_feats, tile=TILE):
    n, din = x.shape
    hf = num_heads * out_feats
    return pl.pallas_call(
        _proj_kernel,
        out_shape=(jax.ShapeDtypeStruct((n, hf), jnp.bfloat16),
                   jax.ShapeDtypeStruct((n, num_heads), jnp.float32),
                   jax.ShapeDtypeStruct((num_heads, n), jnp.float32)),
        grid_spec=pltpu.PrefetchScalarGridSpec(
            num_scalar_prefetch=0, grid=(n // tile,),
            in_specs=[
                pl.BlockSpec((tile, din), lambda i: (i, 0)),
                pl.BlockSpec((din, hf), lambda i: (0, 0)),
                pl.BlockSpec((num_heads, hf), lambda i: (0, 0)),
                pl.BlockSpec((hf, num_heads), lambda i: (0, 0)),
            ],
            out_specs=[
                pl.BlockSpec((tile, hf), lambda i: (i, 0)),
                pl.BlockSpec((tile, num_heads), lambda i: (i, 0)),
                pl.BlockSpec((num_heads, tile), lambda i: (0, i)),
            ]),
        compiler_params=pltpu.CompilerParams(
            dimension_semantics=("parallel",)),
    )(x, w, al_t, ar_pk)


# ---------------------------------------------------------------------------
# Kernel B: masked softmax + aggregation, tiled (dst, src) with online softmax.
# ---------------------------------------------------------------------------
def _attn_kernel(er_ref, elt_ref, feat_ref, adj_ref, out_ref,
                 m_sc, l_sc, acc_sc, *,
                 num_heads, out_feats, negative_slope, apply_elu, mean_heads):
    s = pl.program_id(1)

    @pl.when(s == 0)
    def _():
        m_sc[...] = jnp.full(m_sc.shape, -1e30, jnp.float32)
        l_sc[...] = jnp.zeros(l_sc.shape, jnp.float32)
        acc_sc[...] = jnp.zeros(acc_sc.shape, jnp.float32)

    # Edge mask for this (dst, src) tile -- computed once, reused by every head.
    mask_f = (adj_ref[...] > 0).astype(jnp.float32)             # (TD, TS) 1.0 on edges
    er = er_ref[...]                                            # (TD, H)  f32
    el_t = elt_ref[...]                                         # (H, TS)  f32
    feat = feat_ref[...]                                        # (TS, H*F) bf16

    for h in range(num_heads):
        # e[j, i] = leaky_relu(er_j + el_i)
        e = er[:, h:h + 1] + el_t[h:h + 1, :]                   # (TD, TS)
        e = jnp.where(e > 0.0, e, negative_slope * e)
        # Online softmax over in-neighbours (src axis = lanes). The running max is
        # taken over all scores in the tile; the softmax stays exact because
        # non-edge terms are zeroed (mask multiply) before entering numerator
        # (acc) and denominator (l). This replaces the additive -1e30 mask and
        # the redundant post-exp select of the previous version.
        m_prev = m_sc[h]                                        # (TD, 1)
        m_new = jnp.maximum(m_prev, jnp.max(e, axis=1, keepdims=True))
        scale = jnp.exp(m_prev - m_new)
        p = jnp.exp(e - m_new) * mask_f
        l_sc[h] = scale * l_sc[h] + jnp.sum(p, axis=1, keepdims=True)
        fh = feat[:, h * out_feats:(h + 1) * out_feats]         # (TS, F) bf16
        acc_sc[h] = scale * acc_sc[h] + jnp.dot(
            p.astype(jnp.bfloat16), fh, preferred_element_type=jnp.float32)
        m_sc[h] = m_new

    @pl.when(s == pl.num_programs(1) - 1)
    def _():
        outs = []
        for h in range(num_heads):
            # Fold 1/denom into the small (TD, F) output instead of dividing the
            # (TD, TS) score matrix; reciprocal runs on the EUP (free slot).
            inv_l = pl.reciprocal(jnp.maximum(l_sc[h], 1e-30), approx=True)
            outs.append(acc_sc[h] * inv_l)
        if mean_heads:
            o = outs[0]
            for t in outs[1:]:
                o = o + t
            o = o * (1.0 / num_heads)
        else:
            o = jnp.concatenate(outs, axis=1)                   # lane-dense single store
        if apply_elu:
            o = jnp.where(o > 0.0, o, jnp.exp(o) - 1.0)
        out_ref[...] = o.astype(out_ref.dtype)


def _aggregate(er, el_t, feat, adj_t_i8, *, num_heads, out_feats,
               negative_slope, apply_elu, mean_heads, tile=TILE):
    n = er.shape[0]
    hf = num_heads * out_feats
    out_cols = out_feats if mean_heads else hf
    kernel = functools.partial(
        _attn_kernel, num_heads=num_heads, out_feats=out_feats,
        negative_slope=negative_slope, apply_elu=apply_elu, mean_heads=mean_heads)
    return pl.pallas_call(
        kernel,
        out_shape=jax.ShapeDtypeStruct((n, out_cols), jnp.float32),
        grid_spec=pltpu.PrefetchScalarGridSpec(
            num_scalar_prefetch=0, grid=(n // tile, n // tile),
            in_specs=[
                pl.BlockSpec((tile, num_heads), lambda d, s: (d, 0)),   # er  (dst)
                pl.BlockSpec((num_heads, tile), lambda d, s: (0, s)),   # el^T (src)
                pl.BlockSpec((tile, hf), lambda d, s: (s, 0)),          # feat (src)
                pl.BlockSpec((tile, tile), lambda d, s: (d, s)),        # adj_t int8
            ],
            out_specs=pl.BlockSpec((tile, out_cols), lambda d, s: (d, 0)),
            scratch_shapes=[
                pltpu.VMEM((num_heads, tile, 1), jnp.float32),          # m
                pltpu.VMEM((num_heads, tile, 1), jnp.float32),          # l
                pltpu.VMEM((num_heads, tile, out_feats), jnp.float32),  # acc
            ]),
        compiler_params=pltpu.CompilerParams(
            dimension_semantics=("parallel", "arbitrary"),  # dst sharded on v7x 2 TCs
            vmem_limit_bytes=32 * 1024 * 1024),
    )(er, el_t, feat, adj_t_i8)


def gat_conv(x, adj_t_i8, w, attn_l, attn_r, *, num_heads, out_feats,
             negative_slope, apply_elu, mean_heads, tile=TILE):
    """One GATConv layer on padded inputs. Returns (N_pad, H*F) or (N_pad, F)."""
    hf = num_heads * out_feats
    # Pack per-head attention vectors block-diagonally so per-node logits are MXU matmuls.
    al_t = jnp.zeros((num_heads, hf), jnp.float32)
    ar_pk = jnp.zeros((hf, num_heads), jnp.float32)
    for h in range(num_heads):
        al_t = al_t.at[h, h * out_feats:(h + 1) * out_feats].set(attn_l[h])
        ar_pk = ar_pk.at[h * out_feats:(h + 1) * out_feats, h].set(attn_r[h])
    feat, er, el_t = _project(x, w, al_t, ar_pk,
                              num_heads=num_heads, out_feats=out_feats, tile=tile)
    return _aggregate(er, el_t, feat, adj_t_i8,
                      num_heads=num_heads, out_feats=out_feats,
                      negative_slope=negative_slope, apply_elu=apply_elu,
                      mean_heads=mean_heads, tile=tile)


def init_gat_params(key, n_layers, in_feats, n_hidden, n_classes, heads):
    """Deterministic synthetic parameters matching the module's __init__ shapes."""
    dims = [(in_feats, n_hidden, heads[0])]
    for l in range(1, n_layers):
        dims.append((n_hidden * heads[l - 1], n_hidden, heads[l]))
    dims.append((n_hidden * heads[-2], n_classes, heads[-1]))

    params = []
    for din, dout, h in dims:
        key, k1, k2, k3 = jax.random.split(key, 4)
        scale = jnp.sqrt(2.0 / (din + dout))
        w = jax.random.normal(k1, (din, h * dout), jnp.float32) * scale
        attn_l = jax.random.normal(k2, (h, dout), jnp.float32) * 0.1
        attn_r = jax.random.normal(k3, (h, dout), jnp.float32) * 0.1
        params.append((w, attn_l, attn_r, h, dout))
    return params


def _pad_rows(a, n_pad):
    n = a.shape[0]
    if n_pad == n:
        return a
    return jnp.pad(a, ((0, n_pad - n),) + ((0, 0),) * (a.ndim - 1))


def gat_forward(params, x, adj, n_layers, negative_slope=0.2, tile=TILE):
    """Mirrors GAT.forward: returns (logit, gat_node_embed)."""
    n = x.shape[0]
    n_pad = int(pl.cdiv(n, tile)) * tile
    # Adjacency transposed (adj_t[dst, src]) and int8: 4x less HBM traffic / VMEM.
    adj_t = (adj > 0).astype(jnp.int8).T
    adj_t = jnp.pad(adj_t, ((0, n_pad - n), (0, n_pad - n)))
    h = _pad_rows(x, n_pad)
    for l in range(n_layers):
        w, al, ar, nh, dout = params[l]
        h = gat_conv(h, adj_t, w, al, ar, num_heads=nh, out_feats=dout,
                     negative_slope=negative_slope, apply_elu=True,
                     mean_heads=False, tile=tile)        # == layer(g, h).flatten(1)
    gat_node_embed = h[:n]
    w, al, ar, nh, dout = params[-1]
    # Reference module hardcodes negative_slope=0.2 for the output layer.
    logit = gat_conv(h, adj_t, w, al, ar, num_heads=nh, out_feats=dout,
                     negative_slope=0.2, apply_elu=False,
                     mean_heads=True, tile=tile)         # == layer(g, h).mean(1)
    return logit[:n], gat_node_embed


if __name__ == "__main__":
    key = jax.random.PRNGKey(0)
    N, in_feats, n_hidden, n_classes = 200, 16, 16, 8   # pads to 256 -> 2x2 grid
    n_layers = 2
    heads = [2, 2, 2]
    negative_slope = 0.2

    k_x, k_adj, k_p = jax.random.split(key, 3)
    x = jax.random.normal(k_x, (N, in_feats), jnp.float32)
    # Synthetic directed graph as dense adjacency (adj[i, j] = 1 iff edge i -> j),
    # with self-loops so every node has at least one in-neighbor (as DGL requires).
    adj = (jax.random.uniform(k_adj, (N, N)) < 0.05).astype(jnp.float32)
    adj = jnp.maximum(adj, jnp.eye(N, dtype=jnp.float32))

    params = init_gat_params(k_p, n_layers, in_feats, n_hidden, n_classes, heads)

    logit, embed = gat_forward(params, x, adj, n_layers, negative_slope)
    logit, embed = jax.block_until_ready((logit, embed))

    assert logit.shape == (N, n_classes), logit.shape
    assert embed.shape == (N, n_hidden * heads[n_layers - 1]), embed.shape
    assert bool(jnp.all(jnp.isfinite(logit))) and bool(jnp.all(jnp.isfinite(embed)))
    print("KERNEL_OK")
</pallas_src>

<mosaic_0001>
module attributes {stable_mosaic.version = 11 : i64} {
  func.func @_proj_kernel(%arg0: i32, %arg1: memref<128x16xf32, #tpu.memory_space<vmem>>, %arg2: memref<16x32xf32, #tpu.memory_space<vmem>>, %arg3: memref<2x32xf32, #tpu.memory_space<vmem>>, %arg4: memref<32x2xf32, #tpu.memory_space<vmem>>, %arg5: memref<128x32xbf16, #tpu.memory_space<vmem>>, %arg6: memref<128x2xf32, #tpu.memory_space<vmem>>, %arg7: memref<2x128xf32, #tpu.memory_space<vmem>>) attributes {dimension_semantics = [#tpu.dimension_semantics<parallel>], iteration_bounds = array<i64: 2>, scalar_prefetch = 0 : i64, scratch_operands = 0 : i64, tpu.core_type = #tpu.core_type<tc>, window_params = [{transform_indices = @transform_0, window_bounds = array<i64: 128, 16>}, {pipeline_mode = #tpu.pipeline_mode<synchronous>, transform_indices = @transform_1, window_bounds = array<i64: 16, 32>}, {pipeline_mode = #tpu.pipeline_mode<synchronous>, transform_indices = @transform_2, window_bounds = array<i64: 2, 32>}, {pipeline_mode = #tpu.pipeline_mode<synchronous>, transform_indices = @transform_3, window_bounds = array<i64: 32, 2>}, {transform_indices = @transform_4, window_bounds = array<i64: 128, 32>}, {transform_indices = @transform_5, window_bounds = array<i64: 128, 2>}, {transform_indices = @transform_6, window_bounds = array<i64: 2, 128>}]} {
    %c0 = arith.constant 0 : index
    %c0_0 = arith.constant 0 : index
    %0 = vector.load %arg1[%c0, %c0_0] : memref<128x16xf32, #tpu.memory_space<vmem>>, vector<128x16xf32>
    %1 = arith.truncf %0 : vector<128x16xf32> to vector<128x16xbf16>
    %c0_1 = arith.constant 0 : index
    %c0_2 = arith.constant 0 : index
    %2 = vector.load %arg2[%c0_1, %c0_2] : memref<16x32xf32, #tpu.memory_space<vmem>>, vector<16x32xf32>
    %3 = arith.truncf %2 : vector<16x32xf32> to vector<16x32xbf16>
    %cst = arith.constant dense<0.000000e+00> : vector<128x32xf32>
    %4 = tpu.matmul %1, %3, %cst {dimension_numbers = #tpu.dot_dimension_numbers<[1], [0], [0], [1], [0, 0, 1, 1], [], []>} : vector<128x16xbf16>, vector<16x32xbf16>, vector<128x32xf32> -> vector<128x32xf32>
    %5 = arith.truncf %4 : vector<128x32xf32> to vector<128x32xbf16>
    %c0_3 = arith.constant 0 : index
    %c0_4 = arith.constant 0 : index
    %6 = vector.load %arg5[%c0_3, %c0_4] : memref<128x32xbf16, #tpu.memory_space<vmem>>, vector<128x32xbf16>
    tpu.vector_store %arg5[%c0_3, %c0_4], %5 {strides = array<i32>} : memref<128x32xbf16, #tpu.memory_space<vmem>>, vector<128x32xbf16>,
    %c0_5 = arith.constant 0 : index
    %c0_6 = arith.constant 0 : index
    %7 = vector.load %arg4[%c0_5, %c0_6] : memref<32x2xf32, #tpu.memory_space<vmem>>, vector<32x2xf32>
    %cst_7 = arith.constant dense<0.000000e+00> : vector<128x2xf32>
    %8 = tpu.matmul %4, %7, %cst_7 {dimension_numbers = #tpu.dot_dimension_numbers<[1], [0], [0], [1], [0, 0, 1, 1], [], []>} : vector<128x32xf32>, vector<32x2xf32>, vector<128x2xf32> -> vector<128x2xf32>
    %c0_8 = arith.constant 0 : index
    %c0_9 = arith.constant 0 : index
    %9 = vector.load %arg6[%c0_8, %c0_9] : memref<128x2xf32, #tpu.memory_space<vmem>>, vector<128x2xf32>
    tpu.vector_store %arg6[%c0_8, %c0_9], %8 {strides = array<i32>} : memref<128x2xf32, #tpu.memory_space<vmem>>, vector<128x2xf32>,
    %c0_10 = arith.constant 0 : index
    %c0_11 = arith.constant 0 : index
    %10 = vector.load %arg3[%c0_10, %c0_11] : memref<2x32xf32, #tpu.memory_space<vmem>>, vector<2x32xf32>
    %cst_12 = arith.constant dense<0.000000e+00> : vector<2x128xf32>
    %11 = tpu.matmul %10, %4, %cst_12 {dimension_numbers = #tpu.dot_dimension_numbers<[1], [1], [0], [0], [0, 0, 1, 0], [], []>} : vector<2x32xf32>, vector<128x32xf32>, vector<2x128xf32> -> vector<2x128xf32>
    %c0_13 = arith.constant 0 : index
    %c0_14 = arith.constant 0 : index
    %12 = vector.load %arg7[%c0_13, %c0_14] : memref<2x128xf32, #tpu.memory_space<vmem>>, vector<2x128xf32>
    tpu.vector_store %arg7[%c0_13, %c0_14], %11 {strides = array<i32>} : memref<2x128xf32, #tpu.memory_space<vmem>>, vector<2x128xf32>,
    return
  }
  func.func @transform_0(%arg0: i32) -> (i32, i32) {
    %c0_i32 = arith.constant 0 : i32
    %c0_i32_0 = arith.constant 0 : i32
    return %arg0, %c0_i32 : i32, i32
  }
  func.func @transform_1(%arg0: i32) -> (i32, i32) {
    %c0_i32 = arith.constant 0 : i32
    %c0_i32_0 = arith.constant 0 : i32
    %c0_i32_1 = arith.constant 0 : i32
    return %c0_i32, %c0_i32_0 : i32, i32
  }
  func.func @transform_2(%arg0: i32) -> (i32, i32) {
    %c0_i32 = arith.constant 0 : i32
    %c0_i32_0 = arith.constant 0 : i32
    %c0_i32_1 = arith.constant 0 : i32
    return %c0_i32, %c0_i32_0 : i32, i32
  }
  func.func @transform_3(%arg0: i32) -> (i32, i32) {
    %c0_i32 = arith.constant 0 : i32
    %c0_i32_0 = arith.constant 0 : i32
    %c0_i32_1 = arith.constant 0 : i32
    return %c0_i32, %c0_i32_0 : i32, i32
  }
  func.func @transform_4(%arg0: i32) -> (i32, i32) {
    %c0_i32 = arith.constant 0 : i32
    %c0_i32_0 = arith.constant 0 : i32
    return %arg0, %c0_i32 : i32, i32
  }
  func.func @transform_5(%arg0: i32) -> (i32, i32) {
    %c0_i32 = arith.constant 0 : i32
    %c0_i32_0 = arith.constant 0 : i32
    return %arg0, %c0_i32 : i32, i32
  }
  func.func @transform_6(%arg0: i32) -> (i32, i32) {
    %c0_i32 = arith.constant 0 : i32
    %c0_i32_0 = arith.constant 0 : i32
    return %c0_i32, %arg0 : i32, i32
  }
}

</mosaic_0001>

<llo_original>
// kernel: tpu_custom_call.1
$region0: #{tpu_custom_call.1}
  #allocation0 [shape = 'u32[]', space=smem, size = 0x4, offset = 0x4, fixed_abs, tag = 'smem constant byte address 0x4 - core index']
  #allocation1 [shape = 'u32[144,128]{1,0:T(1,128)}', space=vmem, size = 0x12000, scoped, tag = 'internal scratch']
  %s0 = inlined_call_operand.vmem [shape: f32[256,16], index: 0, kind: input, shape index: {}]
  %s1 = inlined_call_operand.vmem [shape: f32[16,32], index: 1, kind: input, shape index: {}]
  %s2 = inlined_call_operand.vmem [shape: f32[2,32], index: 2, kind: input, shape index: {}]
  %s3 = inlined_call_operand.vmem [shape: f32[32,2], index: 3, kind: input, shape index: {}]
  %s4 = inlined_call_operand.vmem [shape: bf16[256,32], index: 4, kind: output, shape index: {0}]
  %s5 = inlined_call_operand.vmem [shape: f32[256,2], index: 5, kind: output, shape index: {1}]
  %s6 = inlined_call_operand.hbm [shape: f32[2,256], index: 6, kind: output, shape index: {2}]
  %7 = xla_tuple %s4, %s5, %s6
  %s8 = sld [smem:[#allocation0]]
  $region65: #{tpu_custom_call.1} parent=0
    _
  %s10 = ssub.s32 1, %s8
  %s11 = scalar_select 0, %s10, %s8
  $region1: #{tpu_custom_call.1} parent=0
    #allocation2 [shape = 'u8[2048]{0}', space=vmem, size = 0x800, scoped, tag = 'output window, operand 2']
    #allocation3 [shape = 's32[2]{0}', space=sflag, size = 0x8, scoped, tag = 'scoped memory for tpu_custom_call.1']
    %12 = vsyncpa [#allocation3], 0
    %s13 = scalar_lea.sflag [#allocation3], 1
    %14 = vsyncpa %s13, 0
    loop: start=0, step=1, limit=4
    $region2: #{tpu_custom_call.1} parent=1 // loop_pre_header
      _
    $region3: #{tpu_custom_call.1} parent=1 // loop_header
      %s16 = sphi 0, %s20
      %p17 = scmp.ge.s32.totalorder %s16, 4
      %s26 = sphi 0, %s28
      %s29 = sphi 0, %s26
      %s30 = sphi 0, %s29
      %s46 = sphi 0, %s30
      %s50 = sphi 0, %s50
      %s52 = sphi 0, %s50
      %s53 = sphi 0, %s52
      %s67 = sphi 0, %s53
      %s71 = sphi 0, %s71
      %s73 = sphi 0, %s71
      %s74 = sphi 0, %s73
      %s88 = sphi 0, %s74
      %s92 = sphi 0, %s92
      %s94 = sphi 0, %s92
      %s95 = sphi 0, %s94
      %s109 = sphi 0, %s95
      %s115 = sphi 0, %s117
      %s118 = sphi 0, %s115
      %s119 = sphi 0, %s118
      %s135 = sphi 0, %s119
      %s141 = sphi 0, %s143
      %s144 = sphi 0, %s141
      %s145 = sphi 0, %s144
      %s161 = sphi 0, %s145
      %s167 = sphi 0, %s169
      %s170 = sphi 0, %s167
      %s171 = sphi 0, %s170
      %s187 = sphi 0, %s171
    $region4: #{tpu_custom_call.1} parent=1 // loop_header_branch
      %19 = sbr.rel (%p17) target = $region8
    $region5: #{tpu_custom_call.1} parent=1 // loop_body
      %s21 = ssub.s32 %s16, 1
      %s22 = ssub.s32 %s16, 2
      %s23 = sadd.s32 %s16, 1
      %s24 = ssub.s32 %s16, %s23
      %p25 = scmp.eq.s32.totalorder %s24, 0
      %s27 = sadd.s32 %s26, 1
      %s28 = scalar_select %p25, %s26, %s27
      %p31 = pneg %p25
      %p32 = scmp.eq.s32.totalorder %s16, 1
      %p33 = por %p31, %p32
      %p34 = scmp.ne.s32.totalorder %s26, %s29
      %p35 = scmp.eq.s32.totalorder %s16, 0
      %p36 = por %p34, %p35
      %p37 = scmp.ne.s32.totalorder %s26, %s29
      %p38 = scmp.eq.s32.totalorder %s21, 1
      %p39 = por %p37, %p38
      %p40 = scmp.ne.s32.totalorder %s29, %s30
      %p41 = scmp.eq.s32.totalorder %s21, 0
      %p42 = por %p40, %p41
      %p43 = scmp.ne.s32.totalorder %s29, %s30
      %p44 = scmp.eq.s32.totalorder %s22, 1
      %p45 = por %p43, %p44
      %p47 = scmp.ne.s32.totalorder %s30, %s46
      %p48 = scmp.eq.s32.totalorder %s22, 0
      %p49 = por %p47, %p48
      %s51 = sadd.s32 %s50, 1
      %p54 = scmp.eq.s32.totalorder %s16, 1
      %p55 = scmp.ne.s32.totalorder %s50, %s52
      %p56 = scmp.eq.s32.totalorder %s16, 0
      %p57 = por %p55, %p56
      %p58 = scmp.ne.s32.totalorder %s50, %s52
      %p59 = scmp.eq.s32.totalorder %s21, 1
      %p60 = por %p58, %p59
      %p61 = scmp.ne.s32.totalorder %s52, %s53
      %p62 = scmp.eq.s32.totalorder %s21, 0
      %p63 = por %p61, %p62
      %p64 = scmp.ne.s32.totalorder %s52, %s53
      %p65 = scmp.eq.s32.totalorder %s22, 1
      %p66 = por %p64, %p65
      %p68 = scmp.ne.s32.totalorder %s53, %s67
      %p69 = scmp.eq.s32.totalorder %s22, 0
      %p70 = por %p68, %p69
      %s72 = sadd.s32 %s71, 1
      %p75 = scmp.eq.s32.totalorder %s16, 1
      %p76 = scmp.ne.s32.totalorder %s71, %s73
      %p77 = scmp.eq.s32.totalorder %s16, 0
      %p78 = por %p76, %p77
      %p79 = scmp.ne.s32.totalorder %s71, %s73
      %p80 = scmp.eq.s32.totalorder %s21, 1
      %p81 = por %p79, %p80
      %p82 = scmp.ne.s32.totalorder %s73, %s74
      %p83 = scmp.eq.s32.totalorder %s21, 0
      %p84 = por %p82, %p83
      %p85 = scmp.ne.s32.totalorder %s73, %s74
      %p86 = scmp.eq.s32.totalorder %s22, 1
      %p87 = por %p85, %p86
      %p89 = scmp.ne.s32.totalorder %s74, %s88
      %p90 = scmp.eq.s32.totalorder %s22, 0
      %p91 = por %p89, %p90
      %s93 = sadd.s32 %s92, 1
      %p96 = scmp.eq.s32.totalorder %s16, 1
      %p97 = scmp.ne.s32.totalorder %s92, %s94
      %p98 = scmp.eq.s32.totalorder %s16, 0
      %p99 = por %p97, %p98
      %p100 = scmp.ne.s32.totalorder %s92, %s94
      %p101 = scmp.eq.s32.totalorder %s21, 1
      %p102 = por %p100, %p101
      %p103 = scmp.ne.s32.totalorder %s94, %s95
      %p104 = scmp.eq.s32.totalorder %s21, 0
      %p105 = por %p103, %p104
      %p106 = scmp.ne.s32.totalorder %s94, %s95
      %p107 = scmp.eq.s32.totalorder %s22, 1
      %p108 = por %p106, %p107
      %p110 = scmp.ne.s32.totalorder %s95, %s109
      %p111 = scmp.eq.s32.totalorder %s22, 0
      %p112 = por %p110, %p111
      %s113 = ssub.s32 %s16, %s23
      %p114 = scmp.eq.s32.totalorder %s113, 0
      %s116 = sadd.s32 %s115, 1
      %s117 = scalar_select %p114, %s115, %s116
      %p120 = pneg %p114
      %p121 = scmp.eq.s32.totalorder %s16, 1
      %p122 = por %p120, %p121
      %p123 = scmp.ne.s32.totalorder %s115, %s118
      %p124 = scmp.eq.s32.totalorder %s16, 0
      %p125 = por %p123, %p124
      %p126 = scmp.ne.s32.totalorder %s115, %s118
      %p127 = scmp.eq.s32.totalorder %s21, 1
      %p128 = por %p126, %p127
      %p129 = scmp.ne.s32.totalorder %s118, %s119
      %p130 = scmp.eq.s32.totalorder %s21, 0
      %p131 = por %p129, %p130
      %p132 = scmp.ne.s32.totalorder %s118, %s119
      %p133 = scmp.eq.s32.totalorder %s22, 1
      %p134 = por %p132, %p133
      %p136 = scmp.ne.s32.totalorder %s119, %s135
      %p137 = scmp.eq.s32.totalorder %s22, 0
      %p138 = por %p136, %p137
      %s139 = ssub.s32 %s16, %s23
      %p140 = scmp.eq.s32.totalorder %s139, 0
      %s142 = sadd.s32 %s141, 1
      %s143 = scalar_select %p140, %s141, %s142
      %p146 = pneg %p140
      %p147 = scmp.eq.s32.totalorder %s16, 1
      %p148 = por %p146, %p147
      %p149 = scmp.ne.s32.totalorder %s141, %s144
      %p150 = scmp.eq.s32.totalorder %s16, 0
      %p151 = por %p149, %p150
      %p152 = scmp.ne.s32.totalorder %s141, %s144
      %p153 = scmp.eq.s32.totalorder %s21, 1
      %p154 = por %p152, %p153
      %p155 = scmp.ne.s32.totalorder %s144, %s145
      %p156 = scmp.eq.s32.totalorder %s21, 0
      %p157 = por %p155, %p156
      %p158 = scmp.ne.s32.totalorder %s144, %s145
      %p159 = scmp.eq.s32.totalorder %s22, 1
      %p160 = por %p158, %p159
      %p162 = scmp.ne.s32.totalorder %s145, %s161
      %p163 = scmp.eq.s32.totalorder %s22, 0
      %p164 = por %p162, %p163
      %s165 = ssub.s32 %s16, %s23
      %p166 = scmp.eq.s32.totalorder %s165, 0
      %s168 = sadd.s32 %s167, 1
      %s169 = scalar_select %p166, %s167, %s168
      %p172 = pneg %p166
      %p173 = scmp.eq.s32.totalorder %s16, 1
      %p174 = por %p172, %p173
      %p175 = scmp.ne.s32.totalorder %s167, %s170
      %p176 = scmp.eq.s32.totalorder %s16, 0
      %p177 = por %p175, %p176
      %p178 = scmp.ne.s32.totalorder %s167, %s170
      %p179 = scmp.eq.s32.totalorder %s21, 1
      %p180 = por %p178, %p179
      %p181 = scmp.ne.s32.totalorder %s170, %s171
      %p182 = scmp.eq.s32.totalorder %s21, 0
      %p183 = por %p181, %p182
      %p184 = scmp.ne.s32.totalorder %s170, %s171
      %p185 = scmp.eq.s32.totalorder %s22, 1
      %p186 = por %p184, %p185
      %p188 = scmp.ne.s32.totalorder %s171, %s187
      %p189 = scmp.eq.s32.totalorder %s22, 0
      %p190 = por %p188, %p189
      %p191 = scmp.le.s32.totalorder 1, %s16
      %p192 = scmp.lt.s32.totalorder %s16, 3
      %p193 = pnand %p191, %p192
      %p194 = pneg %p193
      // Predicated region
      $region9: #{tpu_custom_call.1} parent=5 // pred_check
        _
      $region10: #{tpu_custom_call.1} parent=5 // pred_check_branch
        %196 = sbr.rel (%p193) target = $region12
      $region11: #{tpu_custom_call.1} parent=5 // pred_region
        %s197 = ssub.s32 %s16, 1
        // Predicated region
        $region13: #{tpu_custom_call.1} parent=11 // pred_check
          %p198 = pneg %p63
        $region14: #{tpu_custom_call.1} parent=11 // pred_check_branch
          %200 = sbr.rel (%p198) target = $region16
        $region15: #{tpu_custom_call.1} parent=11 // pred_region
          _
        $region16: #{tpu_custom_call.1} parent=11 // pred_fallthru
          _
        // Predicated region
        $region17: #{tpu_custom_call.1} parent=11 // pred_check
          %p201 = pneg %p84
        $region18: #{tpu_custom_call.1} parent=11 // pred_check_branch
          %203 = sbr.rel (%p201) target = $region20
        $region19: #{tpu_custom_call.1} parent=11 // pred_region
          _
        $region20: #{tpu_custom_call.1} parent=11 // pred_fallthru
          _
        // Predicated region
        $region21: #{tpu_custom_call.1} parent=11 // pred_check
          %p204 = pneg %p105
        $region22: #{tpu_custom_call.1} parent=11 // pred_check_branch
          %206 = sbr.rel (%p204) target = $region24
        $region23: #{tpu_custom_call.1} parent=11 // pred_region
          _
        $region24: #{tpu_custom_call.1} parent=11 // pred_fallthru
          _
      $region12: #{tpu_custom_call.1} parent=5 // pred_fallthru
        _
      %p207 = scmp.lt.s32.totalorder %s16, 2
      // Predicated region
      $region25: #{tpu_custom_call.1} parent=5 // pred_check
        %p208 = pneg %p207
      $region26: #{tpu_custom_call.1} parent=5 // pred_check_branch
        %210 = sbr.rel (%p208) target = $region28
      $region27: #{tpu_custom_call.1} parent=5 // pred_region
        // Predicated region
        $region29: #{tpu_custom_call.1} parent=27 // pred_check
          %p211 = pneg %p36
        $region30: #{tpu_custom_call.1} parent=27 // pred_check_branch
          %213 = sbr.rel (%p211) target = $region32
        $region31: #{tpu_custom_call.1} parent=27 // pred_region
          %s214 = smul.u32 16, %s16
          %p215 = scmp.lt.s32.totalorder %s214, 31
          %s216 = scalar_select %p215, %s214, 31
          %s217 = smul.addr %s216, 8
          %s218 = scalar_lea.vmem %s0, %s217
          %s219 = smul.u32 16, %s16
        $region32: #{tpu_custom_call.1} parent=27 // pred_fallthru
          _
      $region28: #{tpu_custom_call.1} parent=5 // pred_fallthru
        _
      %p220 = scmp.le.s32.totalorder 1, %s16
      %p221 = scmp.lt.s32.totalorder %s16, 3
      %p222 = pnand %p220, %p221
      %p223 = pneg %p222
      // Predicated region
      $region33: #{tpu_custom_call.1} parent=5 // pred_check
        _
      $region34: #{tpu_custom_call.1} parent=5 // pred_check_branch
        %225 = sbr.rel (%p222) target = $region36
      $region35: #{tpu_custom_call.1} parent=5 // pred_region
        %s226 = ssub.s32 %s16, 1
        %s227 = smul.u32 16, %s21
        %p228 = scmp.lt.s32.totalorder %s227, 31
        %s229 = scalar_select %p228, %s227, 31
        %s230 = smul.addr %s229, 8
        %s231 = scalar_lea.vmem %s0, %s230
        %p232 = pneg %p42
        %p233 = pneg %p39
        %p234 = pneg %p63
        %p235 = pneg %p60
        %p236 = pneg %p84
        %p237 = pneg %p81
        %p238 = pneg %p105
        %p239 = pneg %p102
        %p240 = pneg %p131
        %p241 = pneg %p128
        %s242 = smul.u32 16, %s21
        %p243 = scmp.lt.s32.totalorder %s242, 31
        %s244 = scalar_select %p243, %s242, 31
        %s245 = smul.addr %s244, 4
        %s246 = scalar_lea.vmem %s4, %s245
        %p247 = pneg %p157
        %p248 = pneg %p154
        %s249 = smul.u32 16, %s21
        %p250 = scmp.lt.s32.totalorder %s249, 31
        %s251 = scalar_select %p250, %s249, 31
        %s252 = smul.addr %s251, 8
        %s253 = scalar_lea.vmem %s5, %s252
        %p254 = pneg %p183
        %p255 = pneg %p180
        %s256 = sand.u32 %s170, 1
        %s257 = scalar_lea.sflag [#allocation3], %s256
        %s258 = sand.u32 %s170, 1
        %s259 = smul.addr %s258, 2
        %s260 = scalar_lea.vmem [#allocation2], %s259
        %s261 = smul.u32 16, %s21
        %p262 = scmp.lt.s32.totalorder %s261, 31
        %s263 = scalar_select %p262, %s261, 31
        %s264 = smul.addr %s263, 8
        %s265 = scalar_lea.vmem %s0, %s264
        %s266 = smul.u32 16, %s21
        %s267 = smul.u32 16, %s21
        %p268 = scmp.lt.s32.totalorder %s267, 31
        %s269 = scalar_select %p268, %s267, 31
        %s270 = smul.addr %s269, 4
        %s271 = scalar_lea.vmem %s4, %s270
        %s272 = smul.u32 16, %s21
        %s273 = smul.u32 16, %s21
        %p274 = scmp.lt.s32.totalorder %s273, 31
        %s275 = scalar_select %p274, %s273, 31
        %s276 = smul.addr %s275, 8
        %s277 = scalar_lea.vmem %s5, %s276
        %s278 = smul.u32 16, %s21
        %v280 = vld [vmem:[%s265] sm:$0xff]
        %v281 = vld [vmem:[%s265 + $0x8] sm:$0xff]
        %v282 = vld [vmem:[%s265 + $0x10] sm:$0xff]
        %v283 = vld [vmem:[%s265 + $0x18] sm:$0xff]
        %v284 = vld [vmem:[%s265 + $0x20] sm:$0xff]
        %v285 = vld [vmem:[%s265 + $0x28] sm:$0xff]
        %v286 = vld [vmem:[%s265 + $0x30] sm:$0xff]
        %v287 = vld [vmem:[%s265 + $0x38] sm:$0xff]
        %v288 = vld [vmem:[%s265 + $0x40] sm:$0xff]
        %v289 = vld [vmem:[%s265 + $0x48] sm:$0xff]
        %v290 = vld [vmem:[%s265 + $0x50] sm:$0xff]
        %v291 = vld [vmem:[%s265 + $0x58] sm:$0xff]
        %v292 = vld [vmem:[%s265 + $0x60] sm:$0xff]
        %v293 = vld [vmem:[%s265 + $0x68] sm:$0xff]
        %v294 = vld [vmem:[%s265 + $0x70] sm:$0xff]
        %v295 = vld [vmem:[%s265 + $0x78] sm:$0xff]
        %v296 = vpack.c.bf16 %v281, %v280
        %v297 = vpack.c.bf16 %v283, %v282
        %v298 = vpack.c.bf16 %v285, %v284
        %v299 = vpack.c.bf16 %v287, %v286
        %v300 = vpack.c.bf16 %v289, %v288
        %v301 = vpack.c.bf16 %v291, %v290
        %v302 = vpack.c.bf16 %v293, %v292
        %v303 = vpack.c.bf16 %v295, %v294
        %v304 = vld [vmem:[%s1] sm:$0xff]
        %v305 = vld [vmem:[%s1 + $0x8] sm:$0xff]
        %v306 = vpack.c.bf16 %v305, %v304
        %vm307 = vcmask 130048
        %v309 = vsel %vm307, %v296, 0
        %v312 = vsel %vm307, %v297, 0
        %v315 = vsel %vm307, %v298, 0
        %v318 = vsel %vm307, %v299, 0
        %v321 = vsel %vm307, %v300, 0
        %v324 = vsel %vm307, %v301, 0
        %v327 = vsel %vm307, %v302, 0
        %v330 = vsel %vm307, %v303, 0
        %332 = vmatprep.subr.bf16.mxu0 0
        %333 = vmatpush1.bf16.msra.mxu0 0
        %334 = vmatprep.subr.bf16.mxu0 0
        %335 = vmatpush1.bf16.msra.mxu0 0
        %336 = vmatprep.subr.bf16.mxu0 0
        %337 = vmatpush1.bf16.msra.mxu0 0
        %338 = vmatprep.subr.bf16.mxu0 0
        %339 = vmatpush1.bf16.msra.mxu0 0
        %340 = vmatprep.subr.bf16.mxu0 0
        %341 = vmatpush1.bf16.msra.mxu0 0
        %342 = vmatprep.subr.bf16.mxu0 0
        %343 = vmatpush1.bf16.msra.mxu0 0
        %344 = vmatprep.subr.bf16.mxu0 0
        %345 = vmatpush1.bf16.msra.mxu0 0
        %346 = vmatprep.subr.bf16.mxu0 0
        %347 = vmatpush1.bf16.msra.mxu0 %v306
        %348 = vmatprep.subr.bf16.mxu0 0
        %349 = vmatpush2.bf16.msra.mxu0 0
        %350 = vmatprep.subr.bf16.mxu0 0
        %351 = vmatpush2.bf16.msra.mxu0 0
        %352 = vmatprep.subr.bf16.mxu0 0
        %353 = vmatpush2.bf16.msra.mxu0 0
        %354 = vmatprep.subr.bf16.mxu0 0
        %355 = vmatpush2.bf16.msra.mxu0 0
        %356 = vmatprep.subr.bf16.mxu0 0
        %357 = vmatpush2.bf16.msra.mxu0 0
        %358 = vmatprep.subr.bf16.mxu0 0
        %359 = vmatpush2.bf16.msra.mxu0 0
        %360 = vmatprep.subr.bf16.mxu0 0
        %361 = vmatpush2.bf16.msra.mxu0 0
        %362 = vmatprep.subr.bf16.mxu0 0
        %363 = vmatpush2.bf16.msra.mxu0 0
        %364 = vmatprep.mubr.bf16.mxu0 0
        %365 = vmatmul.mubr.bf16.gmra.mxu0 %v309
        %v366 = vpop.f32.mrf.mxu0
        %v367 = vadd.f32 0.0, %v366
        %v368 = vpop.f32.mrf.mxu0
        %v369 = vpop.f32.mrf.mxu0
        %v370 = vadd.f32 0.0, %v369
        %v371 = vpop.f32.mrf.mxu0
        %372 = vmatprep.mubr.bf16.mxu0 0
        %373 = vmatmul.mubr.bf16.gmra.mxu0 %v312
        %v374 = vpop.f32.mrf.mxu0
        %v375 = vadd.f32 0.0, %v374
        %v376 = vpop.f32.mrf.mxu0
        %v377 = vpop.f32.mrf.mxu0
        %v378 = vadd.f32 0.0, %v377
        %v379 = vpop.f32.mrf.mxu0
        %380 = vmatprep.mubr.bf16.mxu0 0
        %381 = vmatmul.mubr.bf16.gmra.mxu0 %v315
        %v382 = vpop.f32.mrf.mxu0
        %v383 = vadd.f32 0.0, %v382
        %v384 = vpop.f32.mrf.mxu0
        %v385 = vpop.f32.mrf.mxu0
        %v386 = vadd.f32 0.0, %v385
        %v387 = vpop.f32.mrf.mxu0
        %388 = vmatprep.mubr.bf16.mxu0 0
        %389 = vmatmul.mubr.bf16.gmra.mxu0 %v318
        %v390 = vpop.f32.mrf.mxu0
        %v391 = vadd.f32 0.0, %v390
        %v392 = vpop.f32.mrf.mxu0
        %v393 = vpop.f32.mrf.mxu0
        %v394 = vadd.f32 0.0, %v393
        %v395 = vpop.f32.mrf.mxu0
        %396 = vmatprep.mubr.bf16.mxu0 0
        %397 = vmatmul.mubr.bf16.gmra.mxu0 %v321
        %v398 = vpop.f32.mrf.mxu0
        %v399 = vadd.f32 0.0, %v398
        %v400 = vpop.f32.mrf.mxu0
        %v401 = vpop.f32.mrf.mxu0
        %v402 = vadd.f32 0.0, %v401
        %v403 = vpop.f32.mrf.mxu0
        %404 = vmatprep.mubr.bf16.mxu0 0
        %405 = vmatmul.mubr.bf16.gmra.mxu0 %v324
        %v406 = vpop.f32.mrf.mxu0
        %v407 = vadd.f32 0.0, %v406
        %v408 = vpop.f32.mrf.mxu0
        %v409 = vpop.f32.mrf.mxu0
        %v410 = vadd.f32 0.0, %v409
        %v411 = vpop.f32.mrf.mxu0
        %412 = vmatprep.mubr.bf16.mxu0 0
        %413 = vmatmul.mubr.bf16.gmra.mxu0 %v327
        %v414 = vpop.f32.mrf.mxu0
        %v415 = vadd.f32 0.0, %v414
        %v416 = vpop.f32.mrf.mxu0
        %v417 = vpop.f32.mrf.mxu0
        %v418 = vadd.f32 0.0, %v417
        %v419 = vpop.f32.mrf.mxu0
        %420 = vmatprep.mubr.bf16.mxu0 0
        %421 = vmatmul.mubr.bf16.gmra.mxu0 %v330
        %v422 = vpop.f32.mrf.mxu0
        %v423 = vadd.f32 0.0, %v422
        %v424 = vpop.f32.mrf.mxu0
        %v425 = vpop.f32.mrf.mxu0
        %v426 = vadd.f32 0.0, %v425
        %v427 = vpop.f32.mrf.mxu0
        %428 = vdwg.mxu0
        %v429 = vpack.c.bf16 %v370, %v367
        %v430 = vpack.c.bf16 %v378, %v375
        %v431 = vpack.c.bf16 %v386, %v383
        %v432 = vpack.c.bf16 %v394, %v391
        %v433 = vpack.c.bf16 %v402, %v399
        %v434 = vpack.c.bf16 %v410, %v407
        %v435 = vpack.c.bf16 %v418, %v415
        %v436 = vpack.c.bf16 %v426, %v423
        %v445 = vunpack.c.l.b16 %v429
        %v446 = vunpack.c.h.b16 %v429
        %v447 = vunpack.c.l.b16 %v430
        %v448 = vunpack.c.h.b16 %v430
        %v449 = vunpack.c.l.b16 %v431
        %v450 = vunpack.c.h.b16 %v431
        %v451 = vunpack.c.l.b16 %v432
        %v452 = vunpack.c.h.b16 %v432
        %v453 = vunpack.c.l.b16 %v433
        %v454 = vunpack.c.h.b16 %v433
        %v455 = vunpack.c.l.b16 %v434
        %v456 = vunpack.c.h.b16 %v434
        %v457 = vunpack.c.l.b16 %v435
        %v458 = vunpack.c.h.b16 %v435
        %v459 = vunpack.c.l.b16 %v436
        %v460 = vunpack.c.h.b16 %v436
        %v461 = vpack.c.b16 %v445, %v445
        %v462 = vpack.c.b16 %v446, %v446
        %v463 = vpack.c.b16 %v447, %v447
        %v464 = vpack.c.b16 %v448, %v448
        %v465 = vpack.c.b16 %v449, %v449
        %v466 = vpack.c.b16 %v450, %v450
        %v467 = vpack.c.b16 %v451, %v451
        %v468 = vpack.c.b16 %v452, %v452
        %v469 = vpack.c.b16 %v453, %v453
        %v470 = vpack.c.b16 %v454, %v454
        %v471 = vpack.c.b16 %v455, %v455
        %v472 = vpack.c.b16 %v456, %v456
        %v473 = vpack.c.b16 %v457, %v457
        %v474 = vpack.c.b16 %v458, %v458
        %v475 = vpack.c.b16 %v459, %v459
        %v476 = vpack.c.b16 %v460, %v460
        %vm493 = vcmask 257024
        %494 = vst.msk [vmem:[%s271] sm:$0xf] %vm493, %v461
        %495 = vst.msk [vmem:[%s271 + $0x4] sm:$0xf] %vm493, %v462
        %496 = vst.msk [vmem:[%s271 + $0x8] sm:$0xf] %vm493, %v463
        %497 = vst.msk [vmem:[%s271 + $0xc] sm:$0xf] %vm493, %v464
        %498 = vst.msk [vmem:[%s271 + $0x10] sm:$0xf] %vm493, %v465
        %499 = vst.msk [vmem:[%s271 + $0x14] sm:$0xf] %vm493, %v466
        %500 = vst.msk [vmem:[%s271 + $0x18] sm:$0xf] %vm493, %v467
        %501 = vst.msk [vmem:[%s271 + $0x1c] sm:$0xf] %vm493, %v468
        %502 = vst.msk [vmem:[%s271 + $0x20] sm:$0xf] %vm493, %v469
        %503 = vst.msk [vmem:[%s271 + $0x24] sm:$0xf] %vm493, %v470
        %504 = vst.msk [vmem:[%s271 + $0x28] sm:$0xf] %vm493, %v471
        %505 = vst.msk [vmem:[%s271 + $0x2c] sm:$0xf] %vm493, %v472
        %506 = vst.msk [vmem:[%s271 + $0x30] sm:$0xf] %vm493, %v473
        %507 = vst.msk [vmem:[%s271 + $0x34] sm:$0xf] %vm493, %v474
        %508 = vst.msk [vmem:[%s271 + $0x38] sm:$0xf] %vm493, %v475
        %509 = vst.msk [vmem:[%s271 + $0x3c] sm:$0xf] %vm493, %v476
        %v510 = vld [vmem:[%s3] sm:$0xff]
        %v511 = vld [vmem:[%s3 + $0x8] sm:$0xff]
        %v512 = vld [vmem:[%s3 + $0x10] sm:$0xff]
        %v513 = vld [vmem:[%s3 + $0x18] sm:$0xff]
        %vm514 = vcmask 261120
        %v516 = vsel %vm514, %v367, 0
        %v519 = vsel %vm514, %v370, 0
        %v522 = vsel %vm514, %v375, 0
        %v525 = vsel %vm514, %v378, 0
        %v528 = vsel %vm514, %v383, 0
        %v531 = vsel %vm514, %v386, 0
        %v534 = vsel %vm514, %v391, 0
        %v537 = vsel %vm514, %v394, 0
        %v540 = vsel %vm514, %v399, 0
        %v543 = vsel %vm514, %v402, 0
        %v546 = vsel %vm514, %v407, 0
        %v549 = vsel %vm514, %v410, 0
        %v552 = vsel %vm514, %v415, 0
        %v555 = vsel %vm514, %v418, 0
        %v558 = vsel %vm514, %v423, 0
        %v561 = vsel %vm514, %v426, 0
        %563 = vmatprep.subr.mxu0 0.0
        %564 = vmatpush1.msra.mxu0 0.0
        %565 = vmatprep.subr.mxu0 0.0
        %566 = vmatpush1.msra.mxu0 0.0
        %567 = vmatprep.subr.mxu0 0.0
        %568 = vmatpush1.msra.mxu0 0.0
        %569 = vmatprep.subr.mxu0 0.0
        %570 = vmatpush1.msra.mxu0 0.0
        %571 = vmatprep.subr.mxu0 0.0
        %572 = vmatpush1.msra.mxu0 0.0
        %573 = vmatprep.subr.mxu0 0.0
        %574 = vmatpush1.msra.mxu0 0.0
        %575 = vmatprep.subr.mxu0 0.0
        %576 = vmatpush1.msra.mxu0 0.0
        %577 = vmatprep.subr.mxu0 0.0
        %578 = vmatpush1.msra.mxu0 0.0
        %579 = vmatprep.subr.mxu0 0.0
        %580 = vmatpush1.msra.mxu0 0.0
        %581 = vmatprep.subr.mxu0 0.0
        %582 = vmatpush1.msra.mxu0 0.0
        %583 = vmatprep.subr.mxu0 0.0
        %584 = vmatpush1.msra.mxu0 0.0
        %585 = vmatprep.subr.mxu0 0.0
        %586 = vmatpush1.msra.mxu0 0.0
        %587 = vmatprep.subr.mxu0 0.0
        %588 = vmatpush1.msra.mxu0 %v513
        %589 = vmatprep.subr.mxu0 0.0
        %590 = vmatpush1.msra.mxu0 %v512
        %591 = vmatprep.subr.mxu0 0.0
        %592 = vmatpush1.msra.mxu0 %v511
        %593 = vmatprep.subr.mxu0 0.0
        %594 = vmatpush1.msra.mxu0 %v510
        %595 = vmatprep.subr.mxu0 0.0
        %596 = vmatpush2.msra.mxu0 0.0
        %597 = vmatprep.subr.mxu0 0.0
        %598 = vmatpush2.msra.mxu0 0.0
        %599 = vmatprep.subr.mxu0 0.0
        %600 = vmatpush2.msra.mxu0 0.0
        %601 = vmatprep.subr.mxu0 0.0
        %602 = vmatpush2.msra.mxu0 0.0
        %603 = vmatprep.subr.mxu0 0.0
        %604 = vmatpush2.msra.mxu0 0.0
        %605 = vmatprep.subr.mxu0 0.0
        %606 = vmatpush2.msra.mxu0 0.0
        %607 = vmatprep.subr.mxu0 0.0
        %608 = vmatpush2.msra.mxu0 0.0
        %609 = vmatprep.subr.mxu0 0.0
        %610 = vmatpush2.msra.mxu0 0.0
        %611 = vmatprep.subr.mxu0 0.0
        %612 = vmatpush2.msra.mxu0 0.0
        %613 = vmatprep.subr.mxu0 0.0
        %614 = vmatpush2.msra.mxu0 0.0
        %615 = vmatprep.subr.mxu0 0.0
        %616 = vmatpush2.msra.mxu0 0.0
        %617 = vmatprep.subr.mxu0 0.0
        %618 = vmatpush2.msra.mxu0 0.0
        %619 = vmatprep.subr.mxu0 0.0
        %620 = vmatpush2.msra.mxu0 0.0
        %621 = vmatprep.subr.mxu0 0.0
        %622 = vmatpush2.msra.mxu0 0.0
        %623 = vmatprep.subr.mxu0 0.0
        %624 = vmatpush2.msra.mxu0 0.0
        %625 = vmatprep.subr.mxu0 0.0
        %626 = vmatpush2.msra.mxu0 0.0
        %627 = vmatprep.mubr.f32.mxu0 0.0
        %628 = vmatmul.mubr.f32.gmra.mxu0 %v516
        %v629 = vpop.f32.mrf.mxu0
        %v630 = vadd.f32 0.0, %v629
        %v631 = vpop.f32.mrf.mxu0
        %632 = vmatprep.mubr.f32.mxu0 0.0
        %633 = vmatmul.mubr.f32.gmra.mxu0 %v519
        %v634 = vpop.f32.mrf.mxu0
        %v635 = vadd.f32 0.0, %v634
        %v636 = vpop.f32.mrf.mxu0
        %637 = vmatprep.mubr.f32.mxu0 0.0
        %638 = vmatmul.mubr.f32.gmra.mxu0 %v522
        %v639 = vpop.f32.mrf.mxu0
        %v640 = vadd.f32 0.0, %v639
        %v641 = vpop.f32.mrf.mxu0
        %642 = vmatprep.mubr.f32.mxu0 0.0
        %643 = vmatmul.mubr.f32.gmra.mxu0 %v525
        %v644 = vpop.f32.mrf.mxu0
        %v645 = vadd.f32 0.0, %v644
        %v646 = vpop.f32.mrf.mxu0
        %647 = vmatprep.mubr.f32.mxu0 0.0
        %648 = vmatmul.mubr.f32.gmra.mxu0 %v528
        %v649 = vpop.f32.mrf.mxu0
        %v650 = vadd.f32 0.0, %v649
        %v651 = vpop.f32.mrf.mxu0
        %652 = vmatprep.mubr.f32.mxu0 0.0
        %653 = vmatmul.mubr.f32.gmra.mxu0 %v531
        %v654 = vpop.f32.mrf.mxu0
        %v655 = vadd.f32 0.0, %v654
        %v656 = vpop.f32.mrf.mxu0
        %657 = vmatprep.mubr.f32.mxu0 0.0
        %658 = vmatmul.mubr.f32.gmra.mxu0 %v534
        %v659 = vpop.f32.mrf.mxu0
        %v660 = vadd.f32 0.0, %v659
        %v661 = vpop.f32.mrf.mxu0
        %662 = vmatprep.mubr.f32.mxu0 0.0
        %663 = vmatmul.mubr.f32.gmra.mxu0 %v537
        %v664 = vpop.f32.mrf.mxu0
        %v665 = vadd.f32 0.0, %v664
        %v666 = vpop.f32.mrf.mxu0
        %667 = vmatprep.mubr.f32.mxu0 0.0
        %668 = vmatmul.mubr.f32.gmra.mxu0 %v540
        %v669 = vpop.f32.mrf.mxu0
        %v670 = vadd.f32 0.0, %v669
        %v671 = vpop.f32.mrf.mxu0
        %672 = vmatprep.mubr.f32.mxu0 0.0
        %673 = vmatmul.mubr.f32.gmra.mxu0 %v543
        %v674 = vpop.f32.mrf.mxu0
        %v675 = vadd.f32 0.0, %v674
        %v676 = vpop.f32.mrf.mxu0
        %677 = vmatprep.mubr.f32.mxu0 0.0
        %678 = vmatmul.mubr.f32.gmra.mxu0 %v546
        %v679 = vpop.f32.mrf.mxu0
        %v680 = vadd.f32 0.0, %v679
        %v681 = vpop.f32.mrf.mxu0
        %682 = vmatprep.mubr.f32.mxu0 0.0
        %683 = vmatmul.mubr.f32.gmra.mxu0 %v549
        %v684 = vpop.f32.mrf.mxu0
        %v685 = vadd.f32 0.0, %v684
        %v686 = vpop.f32.mrf.mxu0
        %687 = vmatprep.mubr.f32.mxu0 0.0
        %688 = vmatmul.mubr.f32.gmra.mxu0 %v552
        %v689 = vpop.f32.mrf.mxu0
        %v690 = vadd.f32 0.0, %v689
        %v691 = vpop.f32.mrf.mxu0
        %692 = vmatprep.mubr.f32.mxu0 0.0
        %693 = vmatmul.mubr.f32.gmra.mxu0 %v555
        %v694 = vpop.f32.mrf.mxu0
        %v695 = vadd.f32 0.0, %v694
        %v696 = vpop.f32.mrf.mxu0
        %697 = vmatprep.mubr.f32.mxu0 0.0
        %698 = vmatmul.mubr.f32.gmra.mxu0 %v558
        %v699 = vpop.f32.mrf.mxu0
        %v700 = vadd.f32 0.0, %v699
        %v701 = vpop.f32.mrf.mxu0
        %702 = vmatprep.mubr.f32.mxu0 0.0
        %703 = vmatmul.mubr.f32.gmra.mxu0 %v561
        %v704 = vpop.f32.mrf.mxu0
        %v705 = vadd.f32 0.0, %v704
        %v706 = vpop.f32.mrf.mxu0
        %707 = vdwg.mxu0
        %vm708 = vcmask 15360
        %709 = vst.msk [vmem:[%s277] sm:$0xff] %vm708, %v630
        %710 = vst.msk [vmem:[%s277 + $0x8] sm:$0xff] %vm708, %v635
        %711 = vst.msk [vmem:[%s277 + $0x10] sm:$0xff] %vm708, %v640
        %712 = vst.msk [vmem:[%s277 + $0x18] sm:$0xff] %vm708, %v645
        %713 = vst.msk [vmem:[%s277 + $0x20] sm:$0xff] %vm708, %v650
        %714 = vst.msk [vmem:[%s277 + $0x28] sm:$0xff] %vm708, %v655
        %715 = vst.msk [vmem:[%s277 + $0x30] sm:$0xff] %vm708, %v660
        %716 = vst.msk [vmem:[%s277 + $0x38] sm:$0xff] %vm708, %v665
        %717 = vst.msk [vmem:[%s277 + $0x40] sm:$0xff] %vm708, %v670
        %718 = vst.msk [vmem:[%s277 + $0x48] sm:$0xff] %vm708, %v675
        %719 = vst.msk [vmem:[%s277 + $0x50] sm:$0xff] %vm708, %v680
        %720 = vst.msk [vmem:[%s277 + $0x58] sm:$0xff] %vm708, %v685
        %721 = vst.msk [vmem:[%s277 + $0x60] sm:$0xff] %vm708, %v690
        %722 = vst.msk [vmem:[%s277 + $0x68] sm:$0xff] %vm708, %v695
        %723 = vst.msk [vmem:[%s277 + $0x70] sm:$0xff] %vm708, %v700
        %724 = vst.msk [vmem:[%s277 + $0x78] sm:$0xff] %vm708, %v705
        %v725 = vld [vmem:[%s2] sm:$0x3]
        %v727 = vsel %vm514, %v725, 0
        %729 = vmatprep.subr.mxu0 0.0
        %730 = vmatpush1.xpose.msra.mxu0 %v561
        %731 = vmatprep.subr.mxu0 0.0
        %732 = vmatpush1.xpose.msra.mxu0 %v558
        %733 = vmatprep.subr.mxu0 0.0
        %734 = vmatpush1.xpose.msra.mxu0 %v555
        %735 = vmatprep.subr.mxu0 0.0
        %736 = vmatpush1.xpose.msra.mxu0 %v552
        %737 = vmatprep.subr.mxu0 0.0
        %738 = vmatpush1.xpose.msra.mxu0 %v549
        %739 = vmatprep.subr.mxu0 0.0
        %740 = vmatpush1.xpose.msra.mxu0 %v546
        %741 = vmatprep.subr.mxu0 0.0
        %742 = vmatpush1.xpose.msra.mxu0 %v543
        %743 = vmatprep.subr.mxu0 0.0
        %744 = vmatpush1.xpose.msra.mxu0 %v540
        %745 = vmatprep.subr.mxu0 0.0
        %746 = vmatpush1.xpose.msra.mxu0 %v537
        %747 = vmatprep.subr.mxu0 0.0
        %748 = vmatpush1.xpose.msra.mxu0 %v534
        %749 = vmatprep.subr.mxu0 0.0
        %750 = vmatpush1.xpose.msra.mxu0 %v531
        %751 = vmatprep.subr.mxu0 0.0
        %752 = vmatpush1.xpose.msra.mxu0 %v528
        %753 = vmatprep.subr.mxu0 0.0
        %754 = vmatpush1.xpose.msra.mxu0 %v525
        %755 = vmatprep.subr.mxu0 0.0
        %756 = vmatpush1.xpose.msra.mxu0 %v522
        %757 = vmatprep.subr.mxu0 0.0
        %758 = vmatpush1.xpose.msra.mxu0 %v519
        %759 = vmatprep.subr.mxu0 0.0
        %760 = vmatpush1.xpose.msra.mxu0 %v516
        %761 = vmatprep.subr.mxu0 0.0
        %762 = vmatpush2.xpose.msra.mxu0 0.0
        %763 = vmatprep.subr.mxu0 0.0
        %764 = vmatpush2.xpose.msra.mxu0 0.0
        %765 = vmatprep.subr.mxu0 0.0
        %766 = vmatpush2.xpose.msra.mxu0 0.0
        %767 = vmatprep.subr.mxu0 0.0
        %768 = vmatpush2.xpose.msra.mxu0 0.0
        %769 = vmatprep.subr.mxu0 0.0
        %770 = vmatpush2.xpose.msra.mxu0 0.0
        %771 = vmatprep.subr.mxu0 0.0
        %772 = vmatpush2.xpose.msra.mxu0 0.0
        %773 = vmatprep.subr.mxu0 0.0
        %774 = vmatpush2.xpose.msra.mxu0 0.0
        %775 = vmatprep.subr.mxu0 0.0
        %776 = vmatpush2.xpose.msra.mxu0 0.0
        %777 = vmatprep.subr.mxu0 0.0
        %778 = vmatpush2.xpose.msra.mxu0 0.0
        %779 = vmatprep.subr.mxu0 0.0
        %780 = vmatpush2.xpose.msra.mxu0 0.0
        %781 = vmatprep.subr.mxu0 0.0
        %782 = vmatpush2.xpose.msra.mxu0 0.0
        %783 = vmatprep.subr.mxu0 0.0
        %784 = vmatpush2.xpose.msra.mxu0 0.0
        %785 = vmatprep.subr.mxu0 0.0
        %786 = vmatpush2.xpose.msra.mxu0 0.0
        %787 = vmatprep.subr.mxu0 0.0
        %788 = vmatpush2.xpose.msra.mxu0 0.0
        %789 = vmatprep.subr.mxu0 0.0
        %790 = vmatpush2.xpose.msra.mxu0 0.0
        %791 = vmatprep.subr.mxu0 0.0
        %792 = vmatpush2.xpose.msra.mxu0 0.0
        %793 = vmatprep.mubr.f32.mxu0 0.0
        %794 = vmatmul.mubr.f32.gmra.mxu0 %v727
        %v795 = vpop.f32.mrf.mxu0
        %v796 = vadd.f32 0.0, %v795
        %v797 = vpop.f32.mrf.mxu0
        %798 = vdwg.mxu0
        %799 = vst [vmem:[%s260] sm:$0x3] %v796
        %s800 = smul.u32 16, %s21
        %p801 = scmp.lt.s32.totalorder %s800, 31
        %s802 = scalar_select %p801, %s800, 31
        %s803 = smul.addr %s802, 4
        %s804 = scalar_lea.vmem %s4, %s803
        %s805 = smul.u32 16, %s21
        %p806 = scmp.lt.s32.totalorder %s805, 31
        %s807 = scalar_select %p806, %s805, 31
        %s808 = smul.addr %s807, 8
        %s809 = scalar_lea.vmem %s5, %s808
        %s810 = sand.u32 %s170, 1
        %s811 = scalar_lea.sflag [#allocation3], %s810
        %s812 = sand.u32 %s170, 1
        %s813 = smul.addr %s812, 2
        %s814 = scalar_lea.vmem [#allocation2], %s813
        // Predicated region
        $region37: #{tpu_custom_call.1} parent=35 // pred_check
          %p815 = pneg %p128
        $region38: #{tpu_custom_call.1} parent=35 // pred_check_branch
          %817 = sbr.rel (%p815) target = $region40
        $region39: #{tpu_custom_call.1} parent=35 // pred_region
          %s818 = smul.u32 16, %s21
        $region40: #{tpu_custom_call.1} parent=35 // pred_fallthru
          _
        // Predicated region
        $region41: #{tpu_custom_call.1} parent=35 // pred_check
          %p819 = pneg %p154
        $region42: #{tpu_custom_call.1} parent=35 // pred_check_branch
          %821 = sbr.rel (%p819) target = $region44
        $region43: #{tpu_custom_call.1} parent=35 // pred_region
          %s822 = smul.u32 16, %s21
        $region44: #{tpu_custom_call.1} parent=35 // pred_fallthru
          _
        // Predicated region
        $region45: #{tpu_custom_call.1} parent=35 // pred_check
          %p823 = pneg %p180
        $region46: #{tpu_custom_call.1} parent=35 // pred_check_branch
          %825 = sbr.rel (%p823) target = $region48
        $region47: #{tpu_custom_call.1} parent=35 // pred_region
          %s827 = ssub.s32 32, 32
          %828 = vsyncadd %s811, %s827
          %s829 = smul.addr %s21, 32
          %s830 = scalar_lea.hbm %s6, %s829
          %s832 = sshll.u32 %s814, 4
          %s833 = int_to_ptr.vmem [resolvable:$true] %s832
          %835 = dma.vmem_to_hbm [thread:$0]  %s833, 32, %s830, %s811
        $region48: #{tpu_custom_call.1} parent=35 // pred_fallthru
          _
      $region36: #{tpu_custom_call.1} parent=5 // pred_fallthru
        _
      %p836 = scmp.le.s32.totalorder 2, %s16
      // Predicated region
      $region49: #{tpu_custom_call.1} parent=5 // pred_check
        %p837 = pneg %p836
      $region50: #{tpu_custom_call.1} parent=5 // pred_check_branch
        %839 = sbr.rel (%p837) target = $region52
      $region51: #{tpu_custom_call.1} parent=5 // pred_region
        %s840 = ssub.s32 %s16, 2
        // Predicated region
        $region53: #{tpu_custom_call.1} parent=51 // pred_check
          %p841 = pneg %p134
        $region54: #{tpu_custom_call.1} parent=51 // pred_check_branch
          %843 = sbr.rel (%p841) target = $region56
        $region55: #{tpu_custom_call.1} parent=51 // pred_region
          %s844 = smul.u32 16, %s22
          %p845 = scmp.lt.s32.totalorder %s844, 31
          %s846 = scalar_select %p845, %s844, 31
          %s847 = smul.addr %s846, 4
          %s848 = scalar_lea.vmem %s4, %s847
        $region56: #{tpu_custom_call.1} parent=51 // pred_fallthru
          _
        // Predicated region
        $region57: #{tpu_custom_call.1} parent=51 // pred_check
          %p849 = pneg %p160
        $region58: #{tpu_custom_call.1} parent=51 // pred_check_branch
          %851 = sbr.rel (%p849) target = $region60
        $region59: #{tpu_custom_call.1} parent=51 // pred_region
          %s852 = smul.u32 16, %s22
          %p853 = scmp.lt.s32.totalorder %s852, 31
          %s854 = scalar_select %p853, %s852, 31
          %s855 = smul.addr %s854, 8
          %s856 = scalar_lea.vmem %s5, %s855
        $region60: #{tpu_custom_call.1} parent=51 // pred_fallthru
          _
        // Predicated region
        $region61: #{tpu_custom_call.1} parent=51 // pred_check
          %p857 = pneg %p186
        $region62: #{tpu_custom_call.1} parent=51 // pred_check_branch
          %859 = sbr.rel (%p857) target = $region64
        $region63: #{tpu_custom_call.1} parent=51 // pred_region
          %s860 = sand.u32 %s171, 1
          %s861 = scalar_lea.sflag [#allocation3], %s860
          %s862 = sand.u32 %s171, 1
          %s863 = smul.addr %s862, 2
          %s864 = scalar_lea.vmem [#allocation2], %s863
          %865 = dma.done %s861, 32
        $region64: #{tpu_custom_call.1} parent=51 // pred_fallthru
          _
      $region52: #{tpu_custom_call.1} parent=5 // pred_fallthru
        _
    $region6: #{tpu_custom_call.1} parent=1 // loop_footer
      %s20 = sadd.s32 1, %s16
    $region7: #{tpu_custom_call.1} parent=1 // loop_footer_branch
      %15 = sbr.rel target = $region3
    $region8: #{tpu_custom_call.1} parent=1 // loop_exit
      _
    %866 = vsyncpa [#allocation3], 1
    %s867 = scalar_lea.sflag [#allocation3], 1
    %868 = vsyncpa %s867, 1

</llo_original>
